<compile_context>
chip_gen: v6e
topology: v6e:2x2x1
jax: 0.10.0
libtpu: 0.0.40
codegen_flags: <defaults>
</compile_context>

<pallas_src>
import math

import jax
import jax.numpy as jnp
import numpy as np
from jax.experimental import pallas as pl
from jax.experimental.pallas import tpu as pltpu

KH = KW = 5
PAD = 2


def _mask_a(kh, kw):
    m = np.ones((kh, kw), np.float32)
    m[kh // 2, kw // 2:] = 0.0
    m[kh // 2 + 1:, :] = 0.0
    return m


_MASK = _mask_a(KH, KW)
_TAPS = tuple((i, j) for i in range(KH) for j in range(KW) if _MASK[i, j] > 0)  # 12 taps


# ----------------------------- Pallas kernel ------------------------------ #
def _masked_conv_kernel(x_ref, w_ref, b_ref, o_ref):
    # x_ref: (1, K, M)  im2col slab of one image (K = ntaps*Cin, M = H*W)
    # w_ref: (Cout, K)  packed mask-allowed weights
    # b_ref: (Cout, 1)  bias
    # o_ref: (1, Cout, M) channel-major output
    y = jnp.dot(w_ref[...], x_ref[0],
                preferred_element_type=jnp.float32) + b_ref[...]
    o_ref[0] = y


def context_prediction_pallas(x_nchw, weight_oihw, bias):
    """Masked ('A') 5x5 conv, stride 1, pad 2.  x: (N, Cin, H, W) float32."""
    N, Cin, H, W = x_nchw.shape
    Cout = weight_oihw.shape[0]
    ntaps = len(_TAPS)
    K = ntaps * Cin
    M = H * W

    # --- wrapper-side packing (negligible HBM traffic at these sizes) ------ #
    x_nhwc = jnp.transpose(x_nchw, (0, 2, 3, 1))
    x_pad = jnp.pad(x_nhwc, ((0, 0), (PAD, PAD), (PAD, PAD), (0, 0)))

    # im2col over only the 12 mask-allowed taps -> lane-dense (N, K, H*W) slab
    # (dropping the zeroed taps is exactly `weight *= mask`).
    shifted = jnp.stack(
        [x_pad[:, ki:ki + H, kj:kj + W, :] for ki, kj in _TAPS],
        axis=1)                                           # (N, ntaps, H, W, Cin)
    slab = jnp.transpose(shifted, (0, 1, 4, 2, 3)).reshape(N, K, M)

    # weights packed tap-major then channel, matching the slab's K ordering.
    w_packed = jnp.stack(
        [weight_oihw[:, :, ki, kj] for ki, kj in _TAPS],
        axis=1).reshape(Cout, K)                          # (Cout, K)

    out = pl.pallas_call(
        _masked_conv_kernel,
        out_shape=jax.ShapeDtypeStruct((N, Cout, M), jnp.float32),
        grid_spec=pltpu.PrefetchScalarGridSpec(
            num_scalar_prefetch=0,
            grid=(N,),  # one image per step; lets v7x split across both TCs
            in_specs=[
                pl.BlockSpec((1, K, M), lambda n: (n, 0, 0)),
                pl.BlockSpec((Cout, K), lambda n: (0, 0)),
                pl.BlockSpec((Cout, 1), lambda n: (0, 0)),
            ],
            out_specs=pl.BlockSpec((1, Cout, M), lambda n: (n, 0, 0)),
        ),
        compiler_params=pltpu.CompilerParams(
            dimension_semantics=("parallel",)),
    )(slab, w_packed, bias.reshape(Cout, 1))

    # channel-major kernel output -> free contiguous reshape (no transpose).
    return out.reshape(N, Cout, H, W)


# ------------------------------ reference ---------------------------------- #
def ref_context_prediction(x_nchw, weight_oihw, bias):
    w_masked = weight_oihw * jnp.asarray(_MASK)[None, None, :, :]
    out = jax.lax.conv_general_dilated(
        x_nchw, w_masked, (1, 1), ((PAD, PAD), (PAD, PAD)),
        dimension_numbers=("NCHW", "OIHW", "NCHW"),
        precision=jax.lax.Precision.HIGHEST)
    return out + bias.reshape(1, -1, 1, 1)


# --------------------------------- main ------------------------------------ #
if __name__ == "__main__":
    N, DIM_IN, DIM, HW = 2, 4, 64, 16
    COUT = 2 * DIM  # ContextPrediction outputs dim*2 channels

    key = jax.random.PRNGKey(0)
    kx, kw, kb = jax.random.split(key, 3)
    x = jax.random.normal(kx, (N, DIM_IN, HW, HW), jnp.float32)

    # PyTorch Conv2d default init bounds, deterministic.
    fan_in = DIM_IN * KH * KW
    bound = 1.0 / math.sqrt(fan_in)
    weight = jax.random.uniform(kw, (COUT, DIM_IN, KH, KW), jnp.float32,
                                -bound, bound)
    bias = jax.random.uniform(kb, (COUT,), jnp.float32, -bound, bound)

    out = jax.block_until_ready(context_prediction_pallas(x, weight, bias))
    ref = jax.block_until_ready(ref_context_prediction(x, weight, bias))

    assert out.shape == (N, COUT, HW, HW), out.shape
    np.testing.assert_allclose(np.asarray(out), np.asarray(ref),
                               rtol=1e-4, atol=1e-4)
    print("KERNEL_OK")
</pallas_src>

<mosaic_0001>
module attributes {stable_mosaic.version = 11 : i64} {
  func.func @_masked_conv_kernel(%arg0: i32, %arg1: memref<1x48x256xf32, #tpu.memory_space<vmem>>, %arg2: memref<128x48xf32, #tpu.memory_space<vmem>>, %arg3: memref<128x1xf32, #tpu.memory_space<vmem>>, %arg4: memref<1x128x256xf32, #tpu.memory_space<vmem>>) attributes {dimension_semantics = [#tpu.dimension_semantics<parallel>], iteration_bounds = array<i64: 2>, scalar_prefetch = 0 : i64, scratch_operands = 0 : i64, tpu.core_type = #tpu.core_type<tc>, window_params = [{transform_indices = @transform_0, window_bounds = array<i64: 1, 48, 256>}, {pipeline_mode = #tpu.pipeline_mode<synchronous>, transform_indices = @transform_1, window_bounds = array<i64: 128, 48>}, {pipeline_mode = #tpu.pipeline_mode<synchronous>, transform_indices = @transform_2, window_bounds = array<i64: 128, 1>}, {transform_indices = @transform_3, window_bounds = array<i64: 1, 128, 256>}]} {
    %c0 = arith.constant 0 : index
    %c0_0 = arith.constant 0 : index
    %0 = vector.load %arg2[%c0, %c0_0] : memref<128x48xf32, #tpu.memory_space<vmem>>, vector<128x48xf32>
    %c0_1 = arith.constant 0 : index
    %c0_2 = arith.constant 0 : index
    %c0_3 = arith.constant 0 : index
    %1 = vector.load %arg1[%c0_1, %c0_2, %c0_3] : memref<1x48x256xf32, #tpu.memory_space<vmem>>, vector<1x48x256xf32>
    %2 = vector.shape_cast %1 : vector<1x48x256xf32> to vector<48x256xf32>
    %cst = arith.constant dense<0.000000e+00> : vector<128x256xf32>
    %3 = tpu.matmul %0, %2, %cst {dimension_numbers = #tpu.dot_dimension_numbers<[1], [0], [0], [1], [0, 0, 1, 1], [], []>} : vector<128x48xf32>, vector<48x256xf32>, vector<128x256xf32> -> vector<128x256xf32>
    %c0_4 = arith.constant 0 : index
    %c0_5 = arith.constant 0 : index
    %4 = vector.load %arg3[%c0_4, %c0_5] : memref<128x1xf32, #tpu.memory_space<vmem>>, vector<128x1xf32>
    %5 = vector.broadcast %4 : vector<128x1xf32> to vector<128x256xf32>
    %6 = arith.addf %3, %5 : vector<128x256xf32>
    %c0_6 = arith.constant 0 : index
    %c0_7 = arith.constant 0 : index
    %c0_8 = arith.constant 0 : index
    %7 = vector.load %arg4[%c0_6, %c0_7, %c0_8] : memref<1x128x256xf32, #tpu.memory_space<vmem>>, vector<1x128x256xf32>
    %8 = vector.shape_cast %7 : vector<1x128x256xf32> to vector<128x256xf32>
    %9 = vector.shape_cast %6 : vector<128x256xf32> to vector<1x128x256xf32>
    tpu.vector_store %arg4[%c0_6, %c0_7, %c0_8], %9 {strides = array<i32>} : memref<1x128x256xf32, #tpu.memory_space<vmem>>, vector<1x128x256xf32>,
    return
  }
  func.func @transform_0(%arg0: i32) -> (i32, i32, i32) {
    %c0_i32 = arith.constant 0 : i32
    %c0_i32_0 = arith.constant 0 : i32
    %c0_i32_1 = arith.constant 0 : i32
    return %arg0, %c0_i32, %c0_i32_0 : i32, i32, i32
  }
  func.func @transform_1(%arg0: i32) -> (i32, i32) {
    %c0_i32 = arith.constant 0 : i32
    %c0_i32_0 = arith.constant 0 : i32
    %c0_i32_1 = arith.constant 0 : i32
    return %c0_i32, %c0_i32_0 : i32, i32
  }
  func.func @transform_2(%arg0: i32) -> (i32, i32) {
    %c0_i32 = arith.constant 0 : i32
    %c0_i32_0 = arith.constant 0 : i32
    %c0_i32_1 = arith.constant 0 : i32
    return %c0_i32, %c0_i32_0 : i32, i32
  }
  func.func @transform_3(%arg0: i32) -> (i32, i32, i32) {
    %c0_i32 = arith.constant 0 : i32
    %c0_i32_0 = arith.constant 0 : i32
    %c0_i32_1 = arith.constant 0 : i32
    return %arg0, %c0_i32, %c0_i32_0 : i32, i32, i32
  }
}

</mosaic_0001>

<llo_original>
// kernel: tpu_custom_call.1
$region0: #{tpu_custom_call.1}
  #allocation0 [shape = 'u32[]', space=smem, size = 0x4, offset = 0x4, fixed_abs, tag = 'smem constant byte address 0x4 - core index']
  #allocation1 [shape = 'u32[144,128]{1,0:T(1,128)}', space=vmem, size = 0x12000, scoped, tag = 'internal scratch']
  %s0 = inlined_call_operand.vmem [shape: f32[2,48,256], index: 0, kind: input, shape index: {}]
  %s1 = inlined_call_operand.vmem [shape: f32[128,48], index: 1, kind: input, shape index: {}]
  %s2 = inlined_call_operand.vmem [shape: f32[128,1], index: 2, kind: input, shape index: {}]
  %s3 = inlined_call_operand.hbm [shape: f32[2,128,256], index: 3, kind: output, shape index: {}]
  %s4 = sld [smem:[#allocation0]]
  $region45: #{tpu_custom_call.1} parent=0
    _
  %s6 = ssub.s32 1, %s4
  %s7 = scalar_select 0, %s6, %s4
  $region1: #{tpu_custom_call.1} parent=0
    #allocation2 [shape = 'u8[262144]{0}', space=vmem, size = 0x40000, scoped, tag = 'output window, operand 0']
    #allocation3 [shape = 's32[2]{0}', space=sflag, size = 0x8, scoped, tag = 'scoped memory for tpu_custom_call.1']
    %8 = vsyncpa [#allocation3], 0
    %s9 = scalar_lea.sflag [#allocation3], 1
    %10 = vsyncpa %s9, 0
    loop: start=0, step=1, limit=4
    $region2: #{tpu_custom_call.1} parent=1 // loop_pre_header
      _
    $region3: #{tpu_custom_call.1} parent=1 // loop_header
      %s12 = sphi 0, %s16
      %p13 = scmp.ge.s32.totalorder %s12, 4
      %s22 = sphi 0, %s24
      %s25 = sphi 0, %s22
      %s26 = sphi 0, %s25
      %s42 = sphi 0, %s26
      %s46 = sphi 0, %s46
      %s48 = sphi 0, %s46
      %s49 = sphi 0, %s48
      %s63 = sphi 0, %s49
      %s67 = sphi 0, %s67
      %s69 = sphi 0, %s67
      %s70 = sphi 0, %s69
      %s84 = sphi 0, %s70
      %s90 = sphi 0, %s92
      %s93 = sphi 0, %s90
      %s94 = sphi 0, %s93
      %s110 = sphi 0, %s94
    $region4: #{tpu_custom_call.1} parent=1 // loop_header_branch
      %15 = sbr.rel (%p13) target = $region8
    $region5: #{tpu_custom_call.1} parent=1 // loop_body
      %s17 = ssub.s32 %s12, 1
      %s18 = ssub.s32 %s12, 2
      %s19 = sadd.s32 %s12, 1
      %s20 = ssub.s32 %s12, %s19
      %p21 = scmp.eq.s32.totalorder %s20, 0
      %s23 = sadd.s32 %s22, 1
      %s24 = scalar_select %p21, %s22, %s23
      %p27 = pneg %p21
      %p28 = scmp.eq.s32.totalorder %s12, 1
      %p29 = por %p27, %p28
      %p30 = scmp.ne.s32.totalorder %s22, %s25
      %p31 = scmp.eq.s32.totalorder %s12, 0
      %p32 = por %p30, %p31
      %p33 = scmp.ne.s32.totalorder %s22, %s25
      %p34 = scmp.eq.s32.totalorder %s17, 1
      %p35 = por %p33, %p34
      %p36 = scmp.ne.s32.totalorder %s25, %s26
      %p37 = scmp.eq.s32.totalorder %s17, 0
      %p38 = por %p36, %p37
      %p39 = scmp.ne.s32.totalorder %s25, %s26
      %p40 = scmp.eq.s32.totalorder %s18, 1
      %p41 = por %p39, %p40
      %p43 = scmp.ne.s32.totalorder %s26, %s42
      %p44 = scmp.eq.s32.totalorder %s18, 0
      %p45 = por %p43, %p44
      %s47 = sadd.s32 %s46, 1
      %p50 = scmp.eq.s32.totalorder %s12, 1
      %p51 = scmp.ne.s32.totalorder %s46, %s48
      %p52 = scmp.eq.s32.totalorder %s12, 0
      %p53 = por %p51, %p52
      %p54 = scmp.ne.s32.totalorder %s46, %s48
      %p55 = scmp.eq.s32.totalorder %s17, 1
      %p56 = por %p54, %p55
      %p57 = scmp.ne.s32.totalorder %s48, %s49
      %p58 = scmp.eq.s32.totalorder %s17, 0
      %p59 = por %p57, %p58
      %p60 = scmp.ne.s32.totalorder %s48, %s49
      %p61 = scmp.eq.s32.totalorder %s18, 1
      %p62 = por %p60, %p61
      %p64 = scmp.ne.s32.totalorder %s49, %s63
      %p65 = scmp.eq.s32.totalorder %s18, 0
      %p66 = por %p64, %p65
      %s68 = sadd.s32 %s67, 1
      %p71 = scmp.eq.s32.totalorder %s12, 1
      %p72 = scmp.ne.s32.totalorder %s67, %s69
      %p73 = scmp.eq.s32.totalorder %s12, 0
      %p74 = por %p72, %p73
      %p75 = scmp.ne.s32.totalorder %s67, %s69
      %p76 = scmp.eq.s32.totalorder %s17, 1
      %p77 = por %p75, %p76
      %p78 = scmp.ne.s32.totalorder %s69, %s70
      %p79 = scmp.eq.s32.totalorder %s17, 0
      %p80 = por %p78, %p79
      %p81 = scmp.ne.s32.totalorder %s69, %s70
      %p82 = scmp.eq.s32.totalorder %s18, 1
      %p83 = por %p81, %p82
      %p85 = scmp.ne.s32.totalorder %s70, %s84
      %p86 = scmp.eq.s32.totalorder %s18, 0
      %p87 = por %p85, %p86
      %s88 = ssub.s32 %s12, %s19
      %p89 = scmp.eq.s32.totalorder %s88, 0
      %s91 = sadd.s32 %s90, 1
      %s92 = scalar_select %p89, %s90, %s91
      %p95 = pneg %p89
      %p96 = scmp.eq.s32.totalorder %s12, 1
      %p97 = por %p95, %p96
      %p98 = scmp.ne.s32.totalorder %s90, %s93
      %p99 = scmp.eq.s32.totalorder %s12, 0
      %p100 = por %p98, %p99
      %p101 = scmp.ne.s32.totalorder %s90, %s93
      %p102 = scmp.eq.s32.totalorder %s17, 1
      %p103 = por %p101, %p102
      %p104 = scmp.ne.s32.totalorder %s93, %s94
      %p105 = scmp.eq.s32.totalorder %s17, 0
      %p106 = por %p104, %p105
      %p107 = scmp.ne.s32.totalorder %s93, %s94
      %p108 = scmp.eq.s32.totalorder %s18, 1
      %p109 = por %p107, %p108
      %p111 = scmp.ne.s32.totalorder %s94, %s110
      %p112 = scmp.eq.s32.totalorder %s18, 0
      %p113 = por %p111, %p112
      %p114 = scmp.le.s32.totalorder 1, %s12
      %p115 = scmp.lt.s32.totalorder %s12, 3
      %p116 = pnand %p114, %p115
      %p117 = pneg %p116
      // Predicated region
      $region9: #{tpu_custom_call.1} parent=5 // pred_check
        _
      $region10: #{tpu_custom_call.1} parent=5 // pred_check_branch
        %119 = sbr.rel (%p116) target = $region12
      $region11: #{tpu_custom_call.1} parent=5 // pred_region
        %s120 = ssub.s32 %s12, 1
        // Predicated region
        $region13: #{tpu_custom_call.1} parent=11 // pred_check
          %p121 = pneg %p59
        $region14: #{tpu_custom_call.1} parent=11 // pred_check_branch
          %123 = sbr.rel (%p121) target = $region16
        $region15: #{tpu_custom_call.1} parent=11 // pred_region
          _
        $region16: #{tpu_custom_call.1} parent=11 // pred_fallthru
          _
        // Predicated region
        $region17: #{tpu_custom_call.1} parent=11 // pred_check
          %p124 = pneg %p80
        $region18: #{tpu_custom_call.1} parent=11 // pred_check_branch
          %126 = sbr.rel (%p124) target = $region20
        $region19: #{tpu_custom_call.1} parent=11 // pred_region
          _
        $region20: #{tpu_custom_call.1} parent=11 // pred_fallthru
          _
      $region12: #{tpu_custom_call.1} parent=5 // pred_fallthru
        _
      %p127 = scmp.lt.s32.totalorder %s12, 2
      // Predicated region
      $region21: #{tpu_custom_call.1} parent=5 // pred_check
        %p128 = pneg %p127
      $region22: #{tpu_custom_call.1} parent=5 // pred_check_branch
        %130 = sbr.rel (%p128) target = $region24
      $region23: #{tpu_custom_call.1} parent=5 // pred_region
        // Predicated region
        $region25: #{tpu_custom_call.1} parent=23 // pred_check
          %p131 = pneg %p32
        $region26: #{tpu_custom_call.1} parent=23 // pred_check_branch
          %133 = sbr.rel (%p131) target = $region28
        $region27: #{tpu_custom_call.1} parent=23 // pred_region
          %p134 = scmp.lt.s32.totalorder %s12, 1
          %s135 = scalar_select %p134, %s12, 1
          %s136 = smul.addr %s135, 12
          %s137 = smul.addr %s136, 8
          %s138 = scalar_lea.vmem %s0, %s137
        $region28: #{tpu_custom_call.1} parent=23 // pred_fallthru
          _
      $region24: #{tpu_custom_call.1} parent=5 // pred_fallthru
        _
      %p139 = scmp.le.s32.totalorder 1, %s12
      %p140 = scmp.lt.s32.totalorder %s12, 3
      %p141 = pnand %p139, %p140
      %p142 = pneg %p141
      // Predicated region
      $region29: #{tpu_custom_call.1} parent=5 // pred_check
        _
      $region30: #{tpu_custom_call.1} parent=5 // pred_check_branch
        %144 = sbr.rel (%p141) target = $region32
      $region31: #{tpu_custom_call.1} parent=5 // pred_region
        %s145 = ssub.s32 %s12, 1
        %p146 = scmp.lt.s32.totalorder %s17, 1
        %s147 = scalar_select %p146, %s17, 1
        %s148 = smul.addr %s147, 12
        %s149 = smul.addr %s148, 8
        %s150 = scalar_lea.vmem %s0, %s149
        %p151 = pneg %p38
        %p152 = pneg %p35
        %p153 = pneg %p59
        %p154 = pneg %p56
        %p155 = pneg %p80
        %p156 = pneg %p77
        %p157 = pneg %p106
        %p158 = pneg %p103
        %s159 = sand.u32 %s93, 1
        %s160 = scalar_lea.sflag [#allocation3], %s159
        %s161 = sand.u32 %s93, 1
        %s162 = smul.addr %s161, 256
        %s163 = scalar_lea.vmem [#allocation2], %s162
        %p164 = scmp.lt.s32.totalorder %s17, 1
        %s165 = scalar_select %p164, %s17, 1
        %s166 = smul.addr %s165, 12
        %s167 = smul.addr %s166, 8
        %s168 = scalar_lea.vmem %s0, %s167
        %v169 = vld [vmem:[%s1] sm:$0xff]
        %v170 = vld [vmem:[%s1 + $0x8] sm:$0xff]
        %v171 = vld [vmem:[%s1 + $0x10] sm:$0xff]
        %v172 = vld [vmem:[%s1 + $0x18] sm:$0xff]
        %v173 = vld [vmem:[%s1 + $0x20] sm:$0xff]
        %v174 = vld [vmem:[%s1 + $0x28] sm:$0xff]
        %v175 = vld [vmem:[%s1 + $0x30] sm:$0xff]
        %v176 = vld [vmem:[%s1 + $0x38] sm:$0xff]
        %v177 = vld [vmem:[%s1 + $0x40] sm:$0xff]
        %v178 = vld [vmem:[%s1 + $0x48] sm:$0xff]
        %v179 = vld [vmem:[%s1 + $0x50] sm:$0xff]
        %v180 = vld [vmem:[%s1 + $0x58] sm:$0xff]
        %v181 = vld [vmem:[%s1 + $0x60] sm:$0xff]
        %v182 = vld [vmem:[%s1 + $0x68] sm:$0xff]
        %v183 = vld [vmem:[%s1 + $0x70] sm:$0xff]
        %v184 = vld [vmem:[%s1 + $0x78] sm:$0xff]
        %v185 = vld [vmem:[%s168] sm:$0xff]
        %v186 = vld [vmem:[%s168 + $0x8] sm:$0xff]
        %v187 = vld [vmem:[%s168 + $0x10] sm:$0xff]
        %v188 = vld [vmem:[%s168 + $0x18] sm:$0xff]
        %v189 = vld [vmem:[%s168 + $0x20] sm:$0xff]
        %v190 = vld [vmem:[%s168 + $0x28] sm:$0xff]
        %v191 = vld [vmem:[%s168 + $0x30] sm:$0xff]
        %v192 = vld [vmem:[%s168 + $0x38] sm:$0xff]
        %v193 = vld [vmem:[%s168 + $0x40] sm:$0xff]
        %v194 = vld [vmem:[%s168 + $0x48] sm:$0xff]
        %v195 = vld [vmem:[%s168 + $0x50] sm:$0xff]
        %v196 = vld [vmem:[%s168 + $0x58] sm:$0xff]
        %v197 = vld [vmem:[%s2] sm:$0xff]
        %v198 = vld [vmem:[%s2 + $0x8] sm:$0xff]
        %v199 = vld [vmem:[%s2 + $0x10] sm:$0xff]
        %v200 = vld [vmem:[%s2 + $0x18] sm:$0xff]
        %v201 = vld [vmem:[%s2 + $0x20] sm:$0xff]
        %v202 = vld [vmem:[%s2 + $0x28] sm:$0xff]
        %v203 = vld [vmem:[%s2 + $0x30] sm:$0xff]
        %v204 = vld [vmem:[%s2 + $0x38] sm:$0xff]
        %v205 = vld [vmem:[%s2 + $0x40] sm:$0xff]
        %v206 = vld [vmem:[%s2 + $0x48] sm:$0xff]
        %v207 = vld [vmem:[%s2 + $0x50] sm:$0xff]
        %v208 = vld [vmem:[%s2 + $0x58] sm:$0xff]
        %v209 = vld [vmem:[%s2 + $0x60] sm:$0xff]
        %v210 = vld [vmem:[%s2 + $0x68] sm:$0xff]
        %v211 = vld [vmem:[%s2 + $0x70] sm:$0xff]
        %v212 = vld [vmem:[%s2 + $0x78] sm:$0xff]
        %214 = vset.pattern.permute.xlu0 0
        %215 = vperm.xlu0 %214, %v197
        %v216 = vpop.permute.xlu0 %215
        %219 = vset.pattern.permute.xlu0 0
        %220 = vperm.xlu0 %219, %v198
        %v221 = vpop.permute.xlu0 %220
        %224 = vset.pattern.permute.xlu0 0
        %225 = vperm.xlu0 %224, %v199
        %v226 = vpop.permute.xlu0 %225
        %229 = vset.pattern.permute.xlu0 0
        %230 = vperm.xlu0 %229, %v200
        %v231 = vpop.permute.xlu0 %230
        %234 = vset.pattern.permute.xlu0 0
        %235 = vperm.xlu0 %234, %v201
        %v236 = vpop.permute.xlu0 %235
        %239 = vset.pattern.permute.xlu0 0
        %240 = vperm.xlu0 %239, %v202
        %v241 = vpop.permute.xlu0 %240
        %244 = vset.pattern.permute.xlu0 0
        %245 = vperm.xlu0 %244, %v203
        %v246 = vpop.permute.xlu0 %245
        %249 = vset.pattern.permute.xlu0 0
        %250 = vperm.xlu0 %249, %v204
        %v251 = vpop.permute.xlu0 %250
        %254 = vset.pattern.permute.xlu0 0
        %255 = vperm.xlu0 %254, %v205
        %v256 = vpop.permute.xlu0 %255
        %259 = vset.pattern.permute.xlu0 0
        %260 = vperm.xlu0 %259, %v206
        %v261 = vpop.permute.xlu0 %260
        %264 = vset.pattern.permute.xlu0 0
        %265 = vperm.xlu0 %264, %v207
        %v266 = vpop.permute.xlu0 %265
        %269 = vset.pattern.permute.xlu0 0
        %270 = vperm.xlu0 %269, %v208
        %v271 = vpop.permute.xlu0 %270
        %274 = vset.pattern.permute.xlu0 0
        %275 = vperm.xlu0 %274, %v209
        %v276 = vpop.permute.xlu0 %275
        %279 = vset.pattern.permute.xlu0 0
        %280 = vperm.xlu0 %279, %v210
        %v281 = vpop.permute.xlu0 %280
        %284 = vset.pattern.permute.xlu0 0
        %285 = vperm.xlu0 %284, %v211
        %v286 = vpop.permute.xlu0 %285
        %289 = vset.pattern.permute.xlu0 0
        %290 = vperm.xlu0 %289, %v212
        %v291 = vpop.permute.xlu0 %290
        %vm293 = vcmask 392192
        %v295 = vsel %vm293, %v169, 0
        %v298 = vsel %vm293, %v170, 0
        %v301 = vsel %vm293, %v171, 0
        %v304 = vsel %vm293, %v172, 0
        %v307 = vsel %vm293, %v173, 0
        %v310 = vsel %vm293, %v174, 0
        %v313 = vsel %vm293, %v175, 0
        %v316 = vsel %vm293, %v176, 0
        %v319 = vsel %vm293, %v177, 0
        %v322 = vsel %vm293, %v178, 0
        %v325 = vsel %vm293, %v179, 0
        %v328 = vsel %vm293, %v180, 0
        %v331 = vsel %vm293, %v181, 0
        %v334 = vsel %vm293, %v182, 0
        %v337 = vsel %vm293, %v183, 0
        %v340 = vsel %vm293, %v184, 0
        %342 = vmatprep.subr.mxu0 0.0
        %343 = vmatpush1.msra.mxu0 0.0
        %344 = vmatprep.subr.mxu0 0.0
        %345 = vmatpush1.msra.mxu0 0.0
        %346 = vmatprep.subr.mxu0 0.0
        %347 = vmatpush1.msra.mxu0 0.0
        %348 = vmatprep.subr.mxu0 0.0
        %349 = vmatpush1.msra.mxu0 0.0
        %350 = vmatprep.subr.mxu0 0.0
        %351 = vmatpush1.msra.mxu0 0.0
        %352 = vmatprep.subr.mxu0 0.0
        %353 = vmatpush1.msra.mxu0 0.0
        %354 = vmatprep.subr.mxu0 0.0
        %355 = vmatpush1.msra.mxu0 0.0
        %356 = vmatprep.subr.mxu0 0.0
        %357 = vmatpush1.msra.mxu0 0.0
        %358 = vmatprep.subr.mxu0 0.0
        %359 = vmatpush1.msra.mxu0 0.0
        %360 = vmatprep.subr.mxu0 0.0
        %361 = vmatpush1.msra.mxu0 0.0
        %362 = vmatprep.subr.mxu0 %v196
        %363 = vmatpush1.msra.mxu0 %v195
        %364 = vmatprep.subr.mxu0 %v194
        %365 = vmatpush1.msra.mxu0 %v193
        %366 = vmatprep.subr.mxu0 %v192
        %367 = vmatpush1.msra.mxu0 %v191
        %368 = vmatprep.subr.mxu0 %v190
        %369 = vmatpush1.msra.mxu0 %v189
        %370 = vmatprep.subr.mxu0 %v188
        %371 = vmatpush1.msra.mxu0 %v187
        %372 = vmatprep.subr.mxu0 %v186
        %373 = vmatpush1.msra.mxu0 %v185
        %374 = vmatprep.subr.mxu0 0.0
        %375 = vmatpush2.msra.mxu0 0.0
        %376 = vmatprep.subr.mxu0 0.0
        %377 = vmatpush2.msra.mxu0 0.0
        %378 = vmatprep.subr.mxu0 0.0
        %379 = vmatpush2.msra.mxu0 0.0
        %380 = vmatprep.subr.mxu0 0.0
        %381 = vmatpush2.msra.mxu0 0.0
        %382 = vmatprep.subr.mxu0 0.0
        %383 = vmatpush2.msra.mxu0 0.0
        %384 = vmatprep.subr.mxu0 0.0
        %385 = vmatpush2.msra.mxu0 0.0
        %386 = vmatprep.subr.mxu0 0.0
        %387 = vmatpush2.msra.mxu0 0.0
        %388 = vmatprep.subr.mxu0 0.0
        %389 = vmatpush2.msra.mxu0 0.0
        %390 = vmatprep.subr.mxu0 0.0
        %391 = vmatpush2.msra.mxu0 0.0
        %392 = vmatprep.subr.mxu0 0.0
        %393 = vmatpush2.msra.mxu0 0.0
        %394 = vmatprep.subr.mxu0 0.0
        %395 = vmatpush2.msra.mxu0 0.0
        %396 = vmatprep.subr.mxu0 0.0
        %397 = vmatpush2.msra.mxu0 0.0
        %398 = vmatprep.subr.mxu0 0.0
        %399 = vmatpush2.msra.mxu0 0.0
        %400 = vmatprep.subr.mxu0 0.0
        %401 = vmatpush2.msra.mxu0 0.0
        %402 = vmatprep.subr.mxu0 0.0
        %403 = vmatpush2.msra.mxu0 0.0
        %404 = vmatprep.subr.mxu0 0.0
        %405 = vmatpush2.msra.mxu0 0.0
        %406 = vmatprep.mubr.f32.mxu0 0.0
        %407 = vmatmul.mubr.f32.gmra.mxu0 %v295
        %v408 = vpop.f32.mrf.mxu0
        %v409 = vadd.f32 %v216, %v408
        %v410 = vpop.f32.mrf.mxu0
        %v411 = vadd.f32 %v216, %v410
        %412 = vmatprep.mubr.f32.mxu0 0.0
        %413 = vmatmul.mubr.f32.gmra.mxu0 %v298
        %v414 = vpop.f32.mrf.mxu0
        %v415 = vadd.f32 %v221, %v414
        %v416 = vpop.f32.mrf.mxu0
        %v417 = vadd.f32 %v221, %v416
        %418 = vmatprep.mubr.f32.mxu0 0.0
        %419 = vmatmul.mubr.f32.gmra.mxu0 %v301
        %v420 = vpop.f32.mrf.mxu0
        %v421 = vadd.f32 %v226, %v420
        %v422 = vpop.f32.mrf.mxu0
        %v423 = vadd.f32 %v226, %v422
        %424 = vmatprep.mubr.f32.mxu0 0.0
        %425 = vmatmul.mubr.f32.gmra.mxu0 %v304
        %v426 = vpop.f32.mrf.mxu0
        %v427 = vadd.f32 %v231, %v426
        %v428 = vpop.f32.mrf.mxu0
        %v429 = vadd.f32 %v231, %v428
        %430 = vmatprep.mubr.f32.mxu0 0.0
        %431 = vmatmul.mubr.f32.gmra.mxu0 %v307
        %v432 = vpop.f32.mrf.mxu0
        %v433 = vadd.f32 %v236, %v432
        %v434 = vpop.f32.mrf.mxu0
        %v435 = vadd.f32 %v236, %v434
        %436 = vmatprep.mubr.f32.mxu0 0.0
        %437 = vmatmul.mubr.f32.gmra.mxu0 %v310
        %v438 = vpop.f32.mrf.mxu0
        %v439 = vadd.f32 %v241, %v438
        %v440 = vpop.f32.mrf.mxu0
        %v441 = vadd.f32 %v241, %v440
        %442 = vmatprep.mubr.f32.mxu0 0.0
        %443 = vmatmul.mubr.f32.gmra.mxu0 %v313
        %v444 = vpop.f32.mrf.mxu0
        %v445 = vadd.f32 %v246, %v444
        %v446 = vpop.f32.mrf.mxu0
        %v447 = vadd.f32 %v246, %v446
        %448 = vmatprep.mubr.f32.mxu0 0.0
        %449 = vmatmul.mubr.f32.gmra.mxu0 %v316
        %v450 = vpop.f32.mrf.mxu0
        %v451 = vadd.f32 %v251, %v450
        %v452 = vpop.f32.mrf.mxu0
        %v453 = vadd.f32 %v251, %v452
        %454 = vmatprep.mubr.f32.mxu0 0.0
        %455 = vmatmul.mubr.f32.gmra.mxu0 %v319
        %v456 = vpop.f32.mrf.mxu0
        %v457 = vadd.f32 %v256, %v456
        %v458 = vpop.f32.mrf.mxu0
        %v459 = vadd.f32 %v256, %v458
        %460 = vmatprep.mubr.f32.mxu0 0.0
        %461 = vmatmul.mubr.f32.gmra.mxu0 %v322
        %v462 = vpop.f32.mrf.mxu0
        %v463 = vadd.f32 %v261, %v462
        %v464 = vpop.f32.mrf.mxu0
        %v465 = vadd.f32 %v261, %v464
        %466 = vmatprep.mubr.f32.mxu0 0.0
        %467 = vmatmul.mubr.f32.gmra.mxu0 %v325
        %v468 = vpop.f32.mrf.mxu0
        %v469 = vadd.f32 %v266, %v468
        %v470 = vpop.f32.mrf.mxu0
        %v471 = vadd.f32 %v266, %v470
        %472 = vmatprep.mubr.f32.mxu0 0.0
        %473 = vmatmul.mubr.f32.gmra.mxu0 %v328
        %v474 = vpop.f32.mrf.mxu0
        %v475 = vadd.f32 %v271, %v474
        %v476 = vpop.f32.mrf.mxu0
        %v477 = vadd.f32 %v271, %v476
        %478 = vmatprep.mubr.f32.mxu0 0.0
        %479 = vmatmul.mubr.f32.gmra.mxu0 %v331
        %v480 = vpop.f32.mrf.mxu0
        %v481 = vadd.f32 %v276, %v480
        %v482 = vpop.f32.mrf.mxu0
        %v483 = vadd.f32 %v276, %v482
        %484 = vmatprep.mubr.f32.mxu0 0.0
        %485 = vmatmul.mubr.f32.gmra.mxu0 %v334
        %v486 = vpop.f32.mrf.mxu0
        %v487 = vadd.f32 %v281, %v486
        %v488 = vpop.f32.mrf.mxu0
        %v489 = vadd.f32 %v281, %v488
        %490 = vmatprep.mubr.f32.mxu0 0.0
        %491 = vmatmul.mubr.f32.gmra.mxu0 %v337
        %v492 = vpop.f32.mrf.mxu0
        %v493 = vadd.f32 %v286, %v492
        %v494 = vpop.f32.mrf.mxu0
        %v495 = vadd.f32 %v286, %v494
        %496 = vmatprep.mubr.f32.mxu0 0.0
        %497 = vmatmul.mubr.f32.gmra.mxu0 %v340
        %v498 = vpop.f32.mrf.mxu0
        %v499 = vadd.f32 %v291, %v498
        %v500 = vpop.f32.mrf.mxu0
        %v501 = vadd.f32 %v291, %v500
        %502 = vdwg.mxu0
        %503 = vst [vmem:[%s163] sm:$0xff] %v409
        %504 = vst [vmem:[%s163 + $0x8] sm:$0xff] %v411
        %505 = vst [vmem:[%s163 + $0x10] sm:$0xff] %v415
        %506 = vst [vmem:[%s163 + $0x18] sm:$0xff] %v417
        %507 = vst [vmem:[%s163 + $0x20] sm:$0xff] %v421
        %508 = vst [vmem:[%s163 + $0x28] sm:$0xff] %v423
        %509 = vst [vmem:[%s163 + $0x30] sm:$0xff] %v427
        %510 = vst [vmem:[%s163 + $0x38] sm:$0xff] %v429
        %511 = vst [vmem:[%s163 + $0x40] sm:$0xff] %v433
        %512 = vst [vmem:[%s163 + $0x48] sm:$0xff] %v435
        %513 = vst [vmem:[%s163 + $0x50] sm:$0xff] %v439
        %514 = vst [vmem:[%s163 + $0x58] sm:$0xff] %v441
        %515 = vst [vmem:[%s163 + $0x60] sm:$0xff] %v445
        %516 = vst [vmem:[%s163 + $0x68] sm:$0xff] %v447
        %517 = vst [vmem:[%s163 + $0x70] sm:$0xff] %v451
        %518 = vst [vmem:[%s163 + $0x78] sm:$0xff] %v453
        %519 = vst [vmem:[%s163 + $0x80] sm:$0xff] %v457
        %520 = vst [vmem:[%s163 + $0x88] sm:$0xff] %v459
        %521 = vst [vmem:[%s163 + $0x90] sm:$0xff] %v463
        %522 = vst [vmem:[%s163 + $0x98] sm:$0xff] %v465
        %523 = vst [vmem:[%s163 + $0xa0] sm:$0xff] %v469
        %524 = vst [vmem:[%s163 + $0xa8] sm:$0xff] %v471
        %525 = vst [vmem:[%s163 + $0xb0] sm:$0xff] %v475
        %526 = vst [vmem:[%s163 + $0xb8] sm:$0xff] %v477
        %527 = vst [vmem:[%s163 + $0xc0] sm:$0xff] %v481
        %528 = vst [vmem:[%s163 + $0xc8] sm:$0xff] %v483
        %529 = vst [vmem:[%s163 + $0xd0] sm:$0xff] %v487
        %530 = vst [vmem:[%s163 + $0xd8] sm:$0xff] %v489
        %531 = vst [vmem:[%s163 + $0xe0] sm:$0xff] %v493
        %532 = vst [vmem:[%s163 + $0xe8] sm:$0xff] %v495
        %533 = vst [vmem:[%s163 + $0xf0] sm:$0xff] %v499
        %534 = vst [vmem:[%s163 + $0xf8] sm:$0xff] %v501
        %s535 = sand.u32 %s93, 1
        %s536 = scalar_lea.sflag [#allocation3], %s535
        %s537 = sand.u32 %s93, 1
        %s538 = smul.addr %s537, 256
        %s539 = scalar_lea.vmem [#allocation2], %s538
        // Predicated region
        $region33: #{tpu_custom_call.1} parent=31 // pred_check
          %p540 = pneg %p103
        $region34: #{tpu_custom_call.1} parent=31 // pred_check_branch
          %542 = sbr.rel (%p540) target = $region36
        $region35: #{tpu_custom_call.1} parent=31 // pred_region
          %s544 = ssub.s32 4096, 4096
          %545 = vsyncadd %s536, %s544
          %s546 = smul.addr %s17, 32
          %s547 = smul.addr %s546, 128
          %s548 = scalar_lea.hbm %s3, %s547
          %s549 = sshll.u32 %s539, 4
          %s550 = int_to_ptr.vmem [resolvable:$true] %s549
          %555 = dma.vmem_to_hbm [thread:$0]  %s550, 4096, %s548, %s536, 256, 256, 16
        $region36: #{tpu_custom_call.1} parent=31 // pred_fallthru
          _
      $region32: #{tpu_custom_call.1} parent=5 // pred_fallthru
        _
      %p556 = scmp.le.s32.totalorder 2, %s12
      // Predicated region
      $region37: #{tpu_custom_call.1} parent=5 // pred_check
        %p557 = pneg %p556
      $region38: #{tpu_custom_call.1} parent=5 // pred_check_branch
        %559 = sbr.rel (%p557) target = $region40
      $region39: #{tpu_custom_call.1} parent=5 // pred_region
        %s560 = ssub.s32 %s12, 2
        // Predicated region
        $region41: #{tpu_custom_call.1} parent=39 // pred_check
          %p561 = pneg %p109
        $region42: #{tpu_custom_call.1} parent=39 // pred_check_branch
          %563 = sbr.rel (%p561) target = $region44
        $region43: #{tpu_custom_call.1} parent=39 // pred_region
          %s564 = sand.u32 %s94, 1
          %s565 = scalar_lea.sflag [#allocation3], %s564
          %s566 = sand.u32 %s94, 1
          %s567 = smul.addr %s566, 256
          %s568 = scalar_lea.vmem [#allocation2], %s567
          %569 = dma.done %s565, 4096
        $region44: #{tpu_custom_call.1} parent=39 // pred_fallthru
          _
      $region40: #{tpu_custom_call.1} parent=5 // pred_fallthru
        _
    $region6: #{tpu_custom_call.1} parent=1 // loop_footer
      %s16 = sadd.s32 1, %s12
    $region7: #{tpu_custom_call.1} parent=1 // loop_footer_branch
      %11 = sbr.rel target = $region3
    $region8: #{tpu_custom_call.1} parent=1 // loop_exit
      _
    %570 = vsyncpa [#allocation3], 1
    %s571 = scalar_lea.sflag [#allocation3], 1
    %572 = vsyncpa %s571, 1

</llo_original>
